<compile_context>
chip_gen: v7x
topology: tpu7x:2x2x1
jax: 0.10.0
libtpu: 0.0.40
codegen_flags: <defaults>
</compile_context>

<pallas_src>
import jax
import jax.numpy as jnp
from jax.experimental import pallas as pl
from jax.experimental.pallas import tpu as pltpu


def _round_up(v, m):
    return ((v + m - 1) // m) * m


def _sublane_multiple(dtype):
    # Second-to-last block dim must be a multiple of this (sublane packing).
    return {4: 8, 2: 16, 1: 32}[jnp.dtype(dtype).itemsize]


def _pick_tile(padded_dim, cap):
    """Largest multiple of 128 that divides `padded_dim` and is <= cap."""
    t = min(padded_dim, cap)
    while padded_dim % t:
        t -= 128
    return t


# -----------------------------------------------------------------------------
# Kernels
# -----------------------------------------------------------------------------

def _resident_w_kernel(x_ref, w_ref, b_ref, o_ref):
    # x_ref: [tm, Kp]; w_ref: [Kp, Np] (whole padded W, DMA'd once -- constant
    # block index across the grid); b_ref: [1, Np] f32; o_ref: [tm, Np].
    acc = jnp.dot(x_ref[...], w_ref[...], preferred_element_type=jnp.float32)
    o_ref[...] = (acc + b_ref[...]).astype(o_ref.dtype)


def _tiled_kernel_f32_out(x_ref, w_ref, b_ref, o_ref):
    # f32 output: accumulate directly into the resident output block
    # (out index_map ignores k), no scratch needed; bias folded into k==0 init.
    k = pl.program_id(2)

    @pl.when(k == 0)
    def _():
        o_ref[...] = jnp.broadcast_to(b_ref[...], o_ref.shape)

    o_ref[...] += jnp.dot(x_ref[...], w_ref[...],
                          preferred_element_type=jnp.float32)


def _tiled_kernel_lowp_out(x_ref, w_ref, b_ref, o_ref, acc_ref):
    # Sub-32-bit output: keep an f32 VMEM accumulator, cast at the last k step.
    k = pl.program_id(2)

    @pl.when(k == 0)
    def _():
        acc_ref[...] = jnp.broadcast_to(b_ref[...], acc_ref.shape)

    acc_ref[...] += jnp.dot(x_ref[...], w_ref[...],
                            preferred_element_type=jnp.float32)

    @pl.when(k == pl.num_programs(2) - 1)
    def _():
        o_ref[...] = acc_ref[...].astype(o_ref.dtype)


# -----------------------------------------------------------------------------
# Parameter prep (once at init) + forward
# -----------------------------------------------------------------------------

def prepare_params(weight, bias, *, compute_dtype=jnp.bfloat16):
    """One-time parameter prep -- call at init, NOT per forward.

    Pads F_in/F_out to multiples of 128 (lane-dense, unmasked `vst` stores),
    transposes W to [F_in, F_out] (plain MXU contraction, no in-kernel
    transpose), and casts to the streaming dtype (bf16 by default; f32 acc is
    kept in-kernel).  Bias stays f32.
    """
    f_out, f_in = weight.shape
    kp = _round_up(f_in, 128)
    np_ = _round_up(f_out, 128)
    w_t = jnp.pad(weight, ((0, np_ - f_out), (0, kp - f_in))).T.astype(compute_dtype)
    b_row = jnp.pad(bias, (0, np_ - f_out)).astype(jnp.float32).reshape(1, np_)
    return w_t, b_row


# Whole-W-resident fast path triggers under this budget (comfortably inside
# the 32 MiB scoped-VMEM default and v7x's 64 MiB physical VMEM).
_RESIDENT_W_VMEM_BUDGET = 24 * 1024 * 1024


def custom_layer_apply(x, w_t, b_row, f_out, *,
                       tm=None, tn=None, tk=None, force_tiled=False):
    """y = dropout(x) @ W^T + b with eval-mode (identity) dropout.

    `w_t` [F_in_pad, F_out_pad] and `b_row` [1, F_out_pad] come from
    `prepare_params`.  x: [B, F_in].
    """
    batch, f_in = x.shape
    kp, np_ = w_t.shape
    compute_dtype = w_t.dtype
    out_dtype = x.dtype

    in_bytes = jnp.dtype(compute_dtype).itemsize
    out_bytes = jnp.dtype(out_dtype).itemsize
    sub = max(_sublane_multiple(compute_dtype), _sublane_multiple(out_dtype))

    # ---- tile sizing --------------------------------------------------------
    tm = tm or min(_round_up(batch, sub), 512)
    tm = _round_up(tm, sub)
    bp = _round_up(batch, tm)
    tn = tn or _pick_tile(np_, 512)
    tk = tk or _pick_tile(kp, 1024)

    # Per-call work on x only (W/bias were padded once in prepare_params).
    xp = x
    if (bp, kp) != (batch, f_in):
        xp = jnp.pad(x, ((0, bp - batch), (0, kp - f_in)))
    xp = xp.astype(compute_dtype)

    flops = 2 * bp * kp * np_
    out_shape = jax.ShapeDtypeStruct((bp, np_), out_dtype)

    w_resident_bytes = (kp * np_ * in_bytes          # whole W, single buffer
                        + 2 * tm * kp * in_bytes     # double-buffered x tile
                        + 2 * tm * np_ * out_bytes   # double-buffered out tile
                        + np_ * 4)                   # bias row

    if not force_tiled and w_resident_bytes <= _RESIDENT_W_VMEM_BUDGET:
        # ---- fast path: whole padded W resident in VMEM (DMA'd exactly once)
        grid = (bp // tm,)
        cost = pl.CostEstimate(
            flops=flops, transcendentals=0,
            bytes_accessed=(xp.size * in_bytes + w_t.size * in_bytes
                            + bp * np_ * out_bytes))
        out = pl.pallas_call(
            _resident_w_kernel,
            out_shape=out_shape,
            grid_spec=pltpu.PrefetchScalarGridSpec(
                num_scalar_prefetch=0,
                grid=grid,
                in_specs=[
                    pl.BlockSpec((tm, kp), lambda i: (i, 0)),    # x tile
                    pl.BlockSpec((kp, np_), lambda i: (0, 0)),   # whole W (resident)
                    pl.BlockSpec((1, np_), lambda i: (0, 0)),    # bias row
                ],
                out_specs=pl.BlockSpec((tm, np_), lambda i: (i, 0)),
            ),
            compiler_params=pltpu.CompilerParams(
                dimension_semantics=("parallel",),
                vmem_limit_bytes=int(min(max(w_resident_bytes + (8 << 20),
                                             32 << 20), 56 << 20)),
            ),
            cost_estimate=cost,
        )(xp, w_t, b_row)
        return out[:batch, :f_out]

    # ---- general path: (M, N, K) tiled grid, K innermost reduction ----------
    # Keep >=2 blocks on the parallel (i, j) axes so both v7x TensorCores get
    # work (no effect on single-TC v5e/v6e).
    if (bp // tm) * (np_ // tn) < 2 and tn >= 256 and tn % 256 == 0:
        tn //= 2

    grid = (bp // tm, np_ // tn, kp // tk)

    # Explicit VMEM budget: double-buffered x/W/out blocks (+ f32 scratch when
    # the output is sub-32-bit) with headroom; capped under v7x's 64 MiB.
    block_bytes = (2 * tm * tk * in_bytes + 2 * tk * tn * in_bytes
                   + 2 * tm * tn * out_bytes + tn * 4)
    if out_dtype != jnp.float32:
        block_bytes += tm * tn * 4
    vmem_limit = int(min(max(block_bytes + (8 << 20), 32 << 20), 56 << 20))

    cost = pl.CostEstimate(
        flops=flops, transcendentals=0,
        bytes_accessed=(xp.size * in_bytes
                        + (bp // tm) * w_t.size * in_bytes  # W re-streamed per M tile
                        + bp * np_ * out_bytes))

    if out_dtype == jnp.float32:
        kernel = _tiled_kernel_f32_out
        scratch = []
    else:
        kernel = _tiled_kernel_lowp_out
        scratch = [pltpu.VMEM((tm, tn), jnp.float32)]

    out = pl.pallas_call(
        kernel,
        out_shape=out_shape,
        grid_spec=pltpu.PrefetchScalarGridSpec(
            num_scalar_prefetch=0,
            grid=grid,
            in_specs=[
                pl.BlockSpec((tm, tk), lambda i, j, k: (i, k)),   # x tile
                pl.BlockSpec((tk, tn), lambda i, j, k: (k, j)),   # W tile ([K, N])
                pl.BlockSpec((1, tn), lambda i, j, k: (0, j)),    # bias tile
            ],
            out_specs=pl.BlockSpec((tm, tn), lambda i, j, k: (i, j)),
            scratch_shapes=scratch,
        ),
        compiler_params=pltpu.CompilerParams(
            dimension_semantics=("parallel", "parallel", "arbitrary"),
            vmem_limit_bytes=vmem_limit,
        ),
        cost_estimate=cost,
    )(xp, w_t, b_row)
    return out[:batch, :f_out]


if __name__ == "__main__":
    # Small shapes consistent with the module: in_features=32, out_features=16.
    B, F_IN, F_OUT = 8, 32, 16
    dropout_rate = 0.5  # identity at eval/inference time

    key = jax.random.PRNGKey(0)
    kx, kw, kb = jax.random.split(key, 3)

    # nn.Linear-style init: U(-1/sqrt(in_features), 1/sqrt(in_features))
    bound = 1.0 / (F_IN ** 0.5)
    weight = jax.random.uniform(kw, (F_OUT, F_IN), jnp.float32, -bound, bound)
    bias = jax.random.uniform(kb, (F_OUT,), jnp.float32, -bound, bound)
    x = jax.random.normal(kx, (B, F_IN), jnp.float32)

    y_ref = x @ weight.T + bias

    # 1) Exact f32-streaming mode (resident-W fast path).
    w32, b32 = prepare_params(weight, bias, compute_dtype=jnp.float32)
    y32 = jax.block_until_ready(custom_layer_apply(x, w32, b32, F_OUT))
    assert y32.shape == (B, F_OUT)
    assert jnp.allclose(y32, y_ref, atol=1e-4, rtol=1e-4)

    # 2) Default fast mode: bf16-streamed x/W, f32 accumulation.
    wbf, bbf = prepare_params(weight, bias)  # bf16 by default
    ybf = jax.block_until_ready(custom_layer_apply(x, wbf, bbf, F_OUT))
    assert ybf.shape == (B, F_OUT)
    assert jnp.allclose(ybf, y_ref, atol=5e-2, rtol=5e-2)

    # 3) Exercise the general tiled (M, N, K) path as well.
    y_tiled = jax.block_until_ready(
        custom_layer_apply(x, w32, b32, F_OUT, force_tiled=True))
    assert jnp.allclose(y_tiled, y_ref, atol=1e-4, rtol=1e-4)

    print("KERNEL_OK")
</pallas_src>

<mosaic_0001>
module attributes {stable_mosaic.version = 11 : i64} {
  func.func @_resident_w_kernel(%arg0: i32, %arg1: memref<8x128xf32, #tpu.memory_space<vmem>>, %arg2: memref<128x128xf32, #tpu.memory_space<vmem>>, %arg3: memref<1x128xf32, #tpu.memory_space<vmem>>, %arg4: memref<8x128xf32, #tpu.memory_space<vmem>>) attributes {dimension_semantics = [#tpu.dimension_semantics<parallel>], iteration_bounds = array<i64: 1>, scalar_prefetch = 0 : i64, scratch_operands = 0 : i64, tpu.core_type = #tpu.core_type<tc>, window_params = [{transform_indices = @transform_0, window_bounds = array<i64: 8, 128>}, {pipeline_mode = #tpu.pipeline_mode<synchronous>, transform_indices = @transform_1, window_bounds = array<i64: 128, 128>}, {pipeline_mode = #tpu.pipeline_mode<synchronous>, transform_indices = @transform_2, window_bounds = array<i64: 1, 128>}, {transform_indices = @transform_3, window_bounds = array<i64: 8, 128>}]} {
    %c0 = arith.constant 0 : index
    %c0_0 = arith.constant 0 : index
    %0 = vector.load %arg1[%c0, %c0_0] : memref<8x128xf32, #tpu.memory_space<vmem>>, vector<8x128xf32>
    %c0_1 = arith.constant 0 : index
    %c0_2 = arith.constant 0 : index
    %1 = vector.load %arg2[%c0_1, %c0_2] : memref<128x128xf32, #tpu.memory_space<vmem>>, vector<128x128xf32>
    %cst = arith.constant dense<0.000000e+00> : vector<8x128xf32>
    %2 = tpu.matmul %0, %1, %cst {dimension_numbers = #tpu.dot_dimension_numbers<[1], [0], [0], [1], [0, 0, 1, 1], [], []>} : vector<8x128xf32>, vector<128x128xf32>, vector<8x128xf32> -> vector<8x128xf32>
    %c0_3 = arith.constant 0 : index
    %c0_4 = arith.constant 0 : index
    %3 = vector.load %arg3[%c0_3, %c0_4] : memref<1x128xf32, #tpu.memory_space<vmem>>, vector<1x128xf32>
    %4 = vector.broadcast %3 : vector<1x128xf32> to vector<8x128xf32>
    %5 = arith.addf %2, %4 : vector<8x128xf32>
    %c0_5 = arith.constant 0 : index
    %c0_6 = arith.constant 0 : index
    %6 = vector.load %arg4[%c0_5, %c0_6] : memref<8x128xf32, #tpu.memory_space<vmem>>, vector<8x128xf32>
    tpu.vector_store %arg4[%c0_5, %c0_6], %5 {strides = array<i32>} : memref<8x128xf32, #tpu.memory_space<vmem>>, vector<8x128xf32>,
    return
  }
  func.func @transform_0(%arg0: i32) -> (i32, i32) {
    %c0_i32 = arith.constant 0 : i32
    %c0_i32_0 = arith.constant 0 : i32
    return %arg0, %c0_i32 : i32, i32
  }
  func.func @transform_1(%arg0: i32) -> (i32, i32) {
    %c0_i32 = arith.constant 0 : i32
    %c0_i32_0 = arith.constant 0 : i32
    %c0_i32_1 = arith.constant 0 : i32
    return %c0_i32, %c0_i32_0 : i32, i32
  }
  func.func @transform_2(%arg0: i32) -> (i32, i32) {
    %c0_i32 = arith.constant 0 : i32
    %c0_i32_0 = arith.constant 0 : i32
    %c0_i32_1 = arith.constant 0 : i32
    return %c0_i32, %c0_i32_0 : i32, i32
  }
  func.func @transform_3(%arg0: i32) -> (i32, i32) {
    %c0_i32 = arith.constant 0 : i32
    %c0_i32_0 = arith.constant 0 : i32
    return %arg0, %c0_i32 : i32, i32
  }
}

</mosaic_0001>

<llo_original>
// kernel: tpu_custom_call.1
$region0: #{tpu_custom_call.1}
  #allocation0 [shape = 'u32[]', space=smem, size = 0x4, offset = 0x4, fixed_abs, tag = 'smem constant byte address 0x4 - core index']
  #allocation1 [shape = 'u32[144,128]{1,0:T(1,128)}', space=vmem, size = 0x12000, scoped, tag = 'internal scratch']
  %s0 = inlined_call_operand.hbm [shape: f32[8,128], index: 0, kind: input, shape index: {}]
  %s1 = inlined_call_operand.hbm [shape: f32[128,128], index: 1, kind: input, shape index: {}]
  %s2 = inlined_call_operand.vmem [shape: f32[1,128], index: 2, kind: input, shape index: {}]
  %s3 = inlined_call_operand.hbm [shape: f32[8,128], index: 3, kind: output, shape index: {}]
  %s4 = sld [smem:[#allocation0]]
  $region30: #{tpu_custom_call.1} parent=0
    _
  %s6 = ssub.s32 1, %s4
  %s7 = scalar_select 0, %s6, %s4
  $region1: #{tpu_custom_call.1} parent=0
    #allocation2 [shape = 'u8[4096]{0}', space=vmem, size = 0x1000, scoped, tag = 'input window, operand 0, single buffered']
    #allocation3 [shape = 's32[1]{0}', space=sflag, size = 0x4, scoped, tag = 'scoped memory for tpu_custom_call.1']
    #allocation4 [shape = 's32[1]{0}', space=sflag, size = 0x4, scoped, tag = 'scoped memory for tpu_custom_call.1']
    #allocation5 [shape = 'u8[65536]{0}', space=vmem, size = 0x10000, scoped, tag = 'input window, operand 1, single buffered']
    #allocation6 [shape = 's32[1]{0}', space=sflag, size = 0x4, scoped, tag = 'scoped memory for tpu_custom_call.1']
    #allocation7 [shape = 'u8[4096]{0}', space=vmem, size = 0x1000, scoped, tag = 'output window, operand 0, single buffered']
    %8 = vsyncpa [#allocation3], 0
    %9 = vsyncpa [#allocation6], 0
    %10 = vsyncpa [#allocation4], 0
    // Predicated region
    $region2: #{tpu_custom_call.1} parent=1 // pred_check
      _
    $region3: #{tpu_custom_call.1} parent=1 // pred_check_branch
      %12 = sbr.rel (0) target = $region5
    $region4: #{tpu_custom_call.1} parent=1 // pred_region
      %s14 = ssub.s32 128, 128
      %15 = vsyncadd [#allocation3], %s14
      %s17 = sshll.u32 [#allocation2], 4
      %s18 = int_to_ptr.vmem [resolvable:$true] %s17
      %20 = dma.hbm_to_vmem [thread:$0]  %s0, 128, %s18, [#allocation3]
    $region5: #{tpu_custom_call.1} parent=1 // pred_fallthru
      _
    // Predicated region
    $region6: #{tpu_custom_call.1} parent=1 // pred_check
      _
    $region7: #{tpu_custom_call.1} parent=1 // pred_check_branch
      %22 = sbr.rel (0) target = $region9
    $region8: #{tpu_custom_call.1} parent=1 // pred_region
      %s24 = ssub.s32 2048, 2048
      %25 = vsyncadd [#allocation6], %s24
      %s26 = sshll.u32 [#allocation5], 4
      %s27 = int_to_ptr.vmem [resolvable:$true] %s26
      %32 = dma.hbm_to_vmem [thread:$0]  %s1, 2048, %s27, [#allocation6], 128, 128, 8
    $region9: #{tpu_custom_call.1} parent=1 // pred_fallthru
      _
    // Predicated region
    $region10: #{tpu_custom_call.1} parent=1 // pred_check
      _
    $region11: #{tpu_custom_call.1} parent=1 // pred_check_branch
      %34 = sbr.rel (0) target = $region13
    $region12: #{tpu_custom_call.1} parent=1 // pred_region
      _
    $region13: #{tpu_custom_call.1} parent=1 // pred_fallthru
      _
    // Predicated region
    $region14: #{tpu_custom_call.1} parent=1 // pred_check
      _
    $region15: #{tpu_custom_call.1} parent=1 // pred_check_branch
      %36 = sbr.rel (0) target = $region17
    $region16: #{tpu_custom_call.1} parent=1 // pred_region
      %37 = dma.done [#allocation3], 128
    $region17: #{tpu_custom_call.1} parent=1 // pred_fallthru
      _
    // Predicated region
    $region18: #{tpu_custom_call.1} parent=1 // pred_check
      _
    $region19: #{tpu_custom_call.1} parent=1 // pred_check_branch
      %39 = sbr.rel (0) target = $region21
    $region20: #{tpu_custom_call.1} parent=1 // pred_region
      %40 = dma.done [#allocation6], 2048
    $region21: #{tpu_custom_call.1} parent=1 // pred_fallthru
      _
    %v41 = vld [vmem:[#allocation2] sm:$0xff]
    %v42 = vld [vmem:[#allocation5] sm:$0xff]
    %v43 = vld [vmem:[#allocation5 + $0x8] sm:$0xff]
    %v44 = vld [vmem:[#allocation5 + $0x10] sm:$0xff]
    %v45 = vld [vmem:[#allocation5 + $0x18] sm:$0xff]
    %v46 = vld [vmem:[#allocation5 + $0x20] sm:$0xff]
    %v47 = vld [vmem:[#allocation5 + $0x28] sm:$0xff]
    %v48 = vld [vmem:[#allocation5 + $0x30] sm:$0xff]
    %v49 = vld [vmem:[#allocation5 + $0x38] sm:$0xff]
    %v50 = vld [vmem:[#allocation5 + $0x40] sm:$0xff]
    %v51 = vld [vmem:[#allocation5 + $0x48] sm:$0xff]
    %v52 = vld [vmem:[#allocation5 + $0x50] sm:$0xff]
    %v53 = vld [vmem:[#allocation5 + $0x58] sm:$0xff]
    %v54 = vld [vmem:[#allocation5 + $0x60] sm:$0xff]
    %v55 = vld [vmem:[#allocation5 + $0x68] sm:$0xff]
    %v56 = vld [vmem:[#allocation5 + $0x70] sm:$0xff]
    %v57 = vld [vmem:[#allocation5 + $0x78] sm:$0xff]
    %v58 = vld [vmem:[%s2] sm:$0x1]
    %v60 = vlaneseq
    %v61 = vshrl.u32 %v60, 7
    %v62 = vsub.s32 0, %v61
    %v63 = vrot.slane %v58, %v62
    %65 = vmatprep.subr.mxu0 0.0
    %66 = vmatpush1.msra.mxu0 %v42
    %67 = vmatprep.subr.mxu0 0.0
    %68 = vmatpush1.msra.mxu0 %v43
    %69 = vmatprep.subr.mxu0 0.0
    %70 = vmatpush1.msra.mxu0 %v44
    %71 = vmatprep.subr.mxu0 0.0
    %72 = vmatpush1.msra.mxu0 %v45
    %73 = vmatprep.subr.mxu0 0.0
    %74 = vmatpush1.msra.mxu0 %v46
    %75 = vmatprep.subr.mxu0 0.0
    %76 = vmatpush1.msra.mxu0 %v47
    %77 = vmatprep.subr.mxu0 0.0
    %78 = vmatpush1.msra.mxu0 %v48
    %79 = vmatprep.subr.mxu0 0.0
    %80 = vmatpush1.msra.mxu0 %v49
    %81 = vmatprep.subr.mxu0 0.0
    %82 = vmatpush1.msra.mxu0 %v50
    %83 = vmatprep.subr.mxu0 0.0
    %84 = vmatpush1.msra.mxu0 %v51
    %85 = vmatprep.subr.mxu0 0.0
    %86 = vmatpush1.msra.mxu0 %v52
    %87 = vmatprep.subr.mxu0 0.0
    %88 = vmatpush1.msra.mxu0 %v53
    %89 = vmatprep.subr.mxu0 0.0
    %90 = vmatpush1.msra.mxu0 %v54
    %91 = vmatprep.subr.mxu0 0.0
    %92 = vmatpush1.msra.mxu0 %v55
    %93 = vmatprep.subr.mxu0 0.0
    %94 = vmatpush1.msra.mxu0 %v56
    %95 = vmatprep.subr.mxu0 0.0
    %96 = vmatpush1.msra.mxu0 %v57
    %97 = vmatprep.subr.mxu0 0.0
    %98 = vmatpush1.msra.mxu0 0.0
    %99 = vmatprep.subr.mxu0 0.0
    %100 = vmatpush1.msra.mxu0 0.0
    %101 = vmatprep.subr.mxu0 0.0
    %102 = vmatpush1.msra.mxu0 0.0
    %103 = vmatprep.subr.mxu0 0.0
    %104 = vmatpush1.msra.mxu0 0.0
    %105 = vmatprep.subr.mxu0 0.0
    %106 = vmatpush1.msra.mxu0 0.0
    %107 = vmatprep.subr.mxu0 0.0
    %108 = vmatpush1.msra.mxu0 0.0
    %109 = vmatprep.subr.mxu0 0.0
    %110 = vmatpush1.msra.mxu0 0.0
    %111 = vmatprep.subr.mxu0 0.0
    %112 = vmatpush1.msra.mxu0 0.0
    %113 = vmatprep.subr.mxu0 0.0
    %114 = vmatpush1.msra.mxu0 0.0
    %115 = vmatprep.subr.mxu0 0.0
    %116 = vmatpush1.msra.mxu0 0.0
    %117 = vmatprep.subr.mxu0 0.0
    %118 = vmatpush1.msra.mxu0 0.0
    %119 = vmatprep.subr.mxu0 0.0
    %120 = vmatpush1.msra.mxu0 0.0
    %121 = vmatprep.subr.mxu0 0.0
    %122 = vmatpush1.msra.mxu0 0.0
    %123 = vmatprep.subr.mxu0 0.0
    %124 = vmatpush1.msra.mxu0 0.0
    %125 = vmatprep.subr.mxu0 0.0
    %126 = vmatpush1.msra.mxu0 0.0
    %127 = vmatprep.subr.mxu0 0.0
    %128 = vmatpush1.msra.mxu0 0.0
    %129 = vmatprep.mubr.f32.mxu0 0.0
    %130 = vmatmul.mubr.f32.gmra.mrb[0].mxu0 %v41
    %v131 = vpop.f32.mrb[0].mxu0
    %v132 = vadd.f32 %v63, %v131
    %v133 = vpop.f32.mrb[0].mxu0
    %134 = vdwg.mxu0
    %135 = vst [vmem:[#allocation7] sm:$0xff] %v132
    // Predicated region
    $region22: #{tpu_custom_call.1} parent=1 // pred_check
      _
    $region23: #{tpu_custom_call.1} parent=1 // pred_check_branch
      %137 = sbr.rel (0) target = $region25
    $region24: #{tpu_custom_call.1} parent=1 // pred_region
      %s139 = ssub.s32 128, 128
      %140 = vsyncadd [#allocation4], %s139
      %s142 = sshll.u32 [#allocation7], 4
      %s143 = int_to_ptr.vmem [resolvable:$true] %s142
      %145 = dma.vmem_to_hbm [thread:$0]  %s143, 128, %s3, [#allocation4]
    $region25: #{tpu_custom_call.1} parent=1 // pred_fallthru
      _
    // Predicated region
    $region26: #{tpu_custom_call.1} parent=1 // pred_check
      _
    $region27: #{tpu_custom_call.1} parent=1 // pred_check_branch
      %147 = sbr.rel (0) target = $region29
    $region28: #{tpu_custom_call.1} parent=1 // pred_region
      %148 = dma.done [#allocation4], 128
    $region29: #{tpu_custom_call.1} parent=1 // pred_fallthru
      _
    %149 = vsyncpa [#allocation3], 1
    %150 = vsyncpa [#allocation6], 1
    %151 = vsyncpa [#allocation4], 1

</llo_original>
